<compile_context>
chip_gen: v7x
topology: tpu7x:2x2x1
jax: 0.10.0
libtpu: 0.0.40
codegen_flags: <defaults>
</compile_context>

<pallas_src>
import functools

import jax
import jax.numpy as jnp
from jax.experimental import pallas as pl
from jax.experimental.pallas import tpu as pltpu


# ----------------------------- kernel ---------------------------------------


def _actor_critic_kernel(
    x_ref,
    w_hi_ref, b_hi_ref, w_ho_ref, b_ho_ref,          # head
    w_ci_ref, b_ci_ref, w_co_ref, b_co_ref,          # critic
    w_mi_ref, b_mi_ref, w_mo_ref, b_mo_ref,          # actor_mean
    w_si_ref, b_si_ref, w_so_ref, b_so_ref,          # actor_log_std
    scale_ref,                                       # actor_log_std_scale (1,1)
    mean_ref, std_ref, value_ref,
):
    f32 = jnp.float32
    x = x_ref[...].astype(f32)

    def linear(h, w_ref, b_ref):
        return (
            jnp.dot(h, w_ref[...].astype(f32), preferred_element_type=f32)
            + b_ref[...].astype(f32)
        )

    def mish(z):
        # softplus written with exp/log only (stable, Mosaic-friendly).
        sp = jnp.maximum(z, 0.0) + jnp.log(1.0 + jnp.exp(-jnp.abs(z)))
        return z * jnp.tanh(sp)

    def exp_basis(z):  # Exp(z) = exp(-z**2)
        return jnp.exp(-(z * z))

    # head: Linear -> Tanh -> Linear -> Mish
    h = jnp.tanh(linear(x, w_hi_ref, b_hi_ref))
    h = mish(linear(h, w_ho_ref, b_ho_ref))

    # critic: Sqr -> Linear -> Mish -> Linear
    c = mish(linear(h * h, w_ci_ref, b_ci_ref))
    value = linear(c, w_co_ref, b_co_ref)

    # Exp(head) is shared by both actor branches.
    eh = exp_basis(h)

    # actor_mean: Exp -> Linear -> Exp -> Linear -> Tanh
    m = exp_basis(linear(eh, w_mi_ref, b_mi_ref))
    mean = jnp.tanh(linear(m, w_mo_ref, b_mo_ref))

    # actor_log_std: Exp -> Linear -> Exp -> Linear -> Exp
    s = exp_basis(linear(eh, w_si_ref, b_si_ref))
    s = exp_basis(linear(s, w_so_ref, b_so_ref))

    # std = exp(log_std_scale * actor_log_std(head))
    std = jnp.exp(scale_ref[...].astype(f32) * s)

    mean_ref[...] = mean.astype(mean_ref.dtype)
    std_ref[...] = std.astype(std_ref.dtype)
    value_ref[...] = value.astype(value_ref.dtype)


# ----------------------------- wrapper ---------------------------------------

_PARAM_ORDER = (
    "w_hi", "b_hi", "w_ho", "b_ho",
    "w_ci", "b_ci", "w_co", "b_co",
    "w_mi", "b_mi", "w_mo", "b_mo",
    "w_si", "b_si", "w_so", "b_so",
    "scale",
)


@functools.partial(jax.jit, static_argnames=())
def actor_critic_forward(x: jax.Array, params: dict) -> tuple:
    """Full ActorCritic forward in a single fused Pallas TPU kernel."""
    B, num_inputs = x.shape
    H = params["w_hi"].shape[1]
    dtype = x.dtype

    # Tile only over batch. For small batches this is a single grid step;
    # for large batches the batch tile is a multiple of 8 so block legality
    # holds and the grid pipelines / shards across TCs ("parallel").
    TB = B if B <= 512 else 512
    grid = (pl.cdiv(B, TB),)

    def batch_spec(cols):
        return pl.BlockSpec((TB, cols), lambda i: (i, 0))

    def resident_spec(shape):
        # Whole (tiny) parameter array, same block every grid step.
        return pl.BlockSpec(shape, lambda i: (0,) * len(shape))

    in_specs = [batch_spec(num_inputs)]
    in_specs += [resident_spec(params[name].shape) for name in _PARAM_ORDER]
    out_specs = (batch_spec(1), batch_spec(1), batch_spec(1))

    out_shape = (
        jax.ShapeDtypeStruct((B, 1), dtype),  # mean
        jax.ShapeDtypeStruct((B, 1), dtype),  # std
        jax.ShapeDtypeStruct((B, 1), dtype),  # value
    )

    # Advisory cost estimate (this call is tiny; helps XLA scheduling).
    macs = num_inputs * H + 4 * H * H + 3 * H
    param_bytes = sum(int(params[n].size) * params[n].dtype.itemsize
                      for n in _PARAM_ORDER)
    cost = pl.CostEstimate(
        flops=2 * B * macs,
        transcendentals=12 * B * H,
        bytes_accessed=int(x.size * x.dtype.itemsize) + param_bytes
        + 3 * B * jnp.dtype(dtype).itemsize,
    )

    mean, std, value = pl.pallas_call(
        _actor_critic_kernel,
        out_shape=out_shape,
        grid=grid,
        in_specs=in_specs,
        out_specs=out_specs,
        compiler_params=pltpu.CompilerParams(
            dimension_semantics=("parallel",),
        ),
        cost_estimate=cost,
    )(x, *(params[name] for name in _PARAM_ORDER))
    return mean, std, value


# ----------------------------- reference & demo ------------------------------


def _reference(x, p):
    def linear(h, w, b):
        return h @ w + b

    def mish(z):
        return z * jnp.tanh(jax.nn.softplus(z))

    def exp_basis(z):
        return jnp.exp(-(z ** 2))

    h = jnp.tanh(linear(x, p["w_hi"], p["b_hi"]))
    h = mish(linear(h, p["w_ho"], p["b_ho"]))
    c = mish(linear(h * h, p["w_ci"], p["b_ci"]))
    value = linear(c, p["w_co"], p["b_co"])
    eh = exp_basis(h)
    m = exp_basis(linear(eh, p["w_mi"], p["b_mi"]))
    mean = jnp.tanh(linear(m, p["w_mo"], p["b_mo"]))
    s = exp_basis(linear(eh, p["w_si"], p["b_si"]))
    s = exp_basis(linear(s, p["w_so"], p["b_so"]))
    std = jnp.exp(p["scale"] * s)
    return mean, std, value


def _init_params(key, num_inputs, hidden, std_init=0.001, dtype=jnp.float32):
    ks = jax.random.split(key, 16)

    def lin(kw, kb, fan_in, fan_out):
        bound = 1.0 / (fan_in ** 0.5)
        w = jax.random.uniform(kw, (fan_in, fan_out), dtype, -bound, bound)
        b = jax.random.uniform(kb, (1, fan_out), dtype, -bound, bound)
        return w, b

    p = {}
    p["w_hi"], p["b_hi"] = lin(ks[0], ks[1], num_inputs, hidden)
    p["w_ho"], p["b_ho"] = lin(ks[2], ks[3], hidden, hidden)
    p["w_ci"], p["b_ci"] = lin(ks[4], ks[5], hidden, hidden)
    p["w_co"], p["b_co"] = lin(ks[6], ks[7], hidden, 1)
    p["w_mi"], p["b_mi"] = lin(ks[8], ks[9], hidden, hidden)
    p["w_mo"], p["b_mo"] = lin(ks[10], ks[11], hidden, 1)
    p["w_si"], p["b_si"] = lin(ks[12], ks[13], hidden, hidden)
    p["w_so"], p["b_so"] = lin(ks[14], ks[15], hidden, 1)
    p["scale"] = jnp.full((1, 1), std_init, dtype)  # actor_log_std_scale
    return p


if __name__ == "__main__":
    hidden_size = 32
    num_inputs = 4   # CartPole continuous state dim
    batch = 8

    key = jax.random.PRNGKey(0)
    k_x, k_p = jax.random.split(key)
    x = jax.random.normal(k_x, (batch, num_inputs), dtype=jnp.float32)
    params = _init_params(k_p, num_inputs, hidden_size)

    mean, std, value = actor_critic_forward(x, params)
    jax.block_until_ready((mean, std, value))

    ref_mean, ref_std, ref_value = _reference(x, params)
    assert mean.shape == (batch, 1) and std.shape == (batch, 1) and value.shape == (batch, 1)
    assert jnp.allclose(mean, ref_mean, atol=1e-5, rtol=1e-5)
    assert jnp.allclose(std, ref_std, atol=1e-5, rtol=1e-5)
    assert jnp.allclose(value, ref_value, atol=1e-5, rtol=1e-5)

    print("KERNEL_OK")
</pallas_src>

<mosaic_0001>
module attributes {stable_mosaic.version = 11 : i64} {
  func.func @_actor_critic_kernel(%arg0: i32, %arg1: memref<8x4xf32, #tpu.memory_space<vmem>>, %arg2: memref<4x32xf32, #tpu.memory_space<vmem>>, %arg3: memref<1x32xf32, #tpu.memory_space<vmem>>, %arg4: memref<32x32xf32, #tpu.memory_space<vmem>>, %arg5: memref<1x32xf32, #tpu.memory_space<vmem>>, %arg6: memref<32x32xf32, #tpu.memory_space<vmem>>, %arg7: memref<1x32xf32, #tpu.memory_space<vmem>>, %arg8: memref<32x1xf32, #tpu.memory_space<vmem>>, %arg9: memref<1x1xf32, #tpu.memory_space<vmem>>, %arg10: memref<32x32xf32, #tpu.memory_space<vmem>>, %arg11: memref<1x32xf32, #tpu.memory_space<vmem>>, %arg12: memref<32x1xf32, #tpu.memory_space<vmem>>, %arg13: memref<1x1xf32, #tpu.memory_space<vmem>>, %arg14: memref<32x32xf32, #tpu.memory_space<vmem>>, %arg15: memref<1x32xf32, #tpu.memory_space<vmem>>, %arg16: memref<32x1xf32, #tpu.memory_space<vmem>>, %arg17: memref<1x1xf32, #tpu.memory_space<vmem>>, %arg18: memref<1x1xf32, #tpu.memory_space<vmem>>, %arg19: memref<8x1xf32, #tpu.memory_space<vmem>>, %arg20: memref<8x1xf32, #tpu.memory_space<vmem>>, %arg21: memref<8x1xf32, #tpu.memory_space<vmem>>) attributes {dimension_semantics = [#tpu.dimension_semantics<parallel>], iteration_bounds = array<i64: 1>, scalar_prefetch = 0 : i64, scratch_operands = 0 : i64, tpu.core_type = #tpu.core_type<tc>, window_params = [{transform_indices = @transform_0, window_bounds = array<i64: 8, 4>}, {pipeline_mode = #tpu.pipeline_mode<synchronous>, transform_indices = @transform_1, window_bounds = array<i64: 4, 32>}, {pipeline_mode = #tpu.pipeline_mode<synchronous>, transform_indices = @transform_2, window_bounds = array<i64: 1, 32>}, {pipeline_mode = #tpu.pipeline_mode<synchronous>, transform_indices = @transform_3, window_bounds = array<i64: 32, 32>}, {pipeline_mode = #tpu.pipeline_mode<synchronous>, transform_indices = @transform_4, window_bounds = array<i64: 1, 32>}, {pipeline_mode = #tpu.pipeline_mode<synchronous>, transform_indices = @transform_5, window_bounds = array<i64: 32, 32>}, {pipeline_mode = #tpu.pipeline_mode<synchronous>, transform_indices = @transform_6, window_bounds = array<i64: 1, 32>}, {pipeline_mode = #tpu.pipeline_mode<synchronous>, transform_indices = @transform_7, window_bounds = array<i64: 32, 1>}, {pipeline_mode = #tpu.pipeline_mode<synchronous>, transform_indices = @transform_8, window_bounds = array<i64: 1, 1>}, {pipeline_mode = #tpu.pipeline_mode<synchronous>, transform_indices = @transform_9, window_bounds = array<i64: 32, 32>}, {pipeline_mode = #tpu.pipeline_mode<synchronous>, transform_indices = @transform_10, window_bounds = array<i64: 1, 32>}, {pipeline_mode = #tpu.pipeline_mode<synchronous>, transform_indices = @transform_11, window_bounds = array<i64: 32, 1>}, {pipeline_mode = #tpu.pipeline_mode<synchronous>, transform_indices = @transform_12, window_bounds = array<i64: 1, 1>}, {pipeline_mode = #tpu.pipeline_mode<synchronous>, transform_indices = @transform_13, window_bounds = array<i64: 32, 32>}, {pipeline_mode = #tpu.pipeline_mode<synchronous>, transform_indices = @transform_14, window_bounds = array<i64: 1, 32>}, {pipeline_mode = #tpu.pipeline_mode<synchronous>, transform_indices = @transform_15, window_bounds = array<i64: 32, 1>}, {pipeline_mode = #tpu.pipeline_mode<synchronous>, transform_indices = @transform_16, window_bounds = array<i64: 1, 1>}, {pipeline_mode = #tpu.pipeline_mode<synchronous>, transform_indices = @transform_17, window_bounds = array<i64: 1, 1>}, {transform_indices = @transform_18, window_bounds = array<i64: 8, 1>}, {transform_indices = @transform_19, window_bounds = array<i64: 8, 1>}, {transform_indices = @transform_20, window_bounds = array<i64: 8, 1>}]} {
    %c0 = arith.constant 0 : index
    %c0_0 = arith.constant 0 : index
    %0 = vector.load %arg1[%c0, %c0_0] : memref<8x4xf32, #tpu.memory_space<vmem>>, vector<8x4xf32>
    %c0_1 = arith.constant 0 : index
    %c0_2 = arith.constant 0 : index
    %1 = vector.load %arg2[%c0_1, %c0_2] : memref<4x32xf32, #tpu.memory_space<vmem>>, vector<4x32xf32>
    %cst = arith.constant dense<0.000000e+00> : vector<8x32xf32>
    %2 = tpu.matmul %0, %1, %cst {dimension_numbers = #tpu.dot_dimension_numbers<[1], [0], [0], [1], [0, 0, 1, 1], [], []>} : vector<8x4xf32>, vector<4x32xf32>, vector<8x32xf32> -> vector<8x32xf32>
    %c0_3 = arith.constant 0 : index
    %c0_4 = arith.constant 0 : index
    %3 = vector.load %arg3[%c0_3, %c0_4] : memref<1x32xf32, #tpu.memory_space<vmem>>, vector<1x32xf32>
    %4 = vector.broadcast %3 : vector<1x32xf32> to vector<8x32xf32>
    %5 = arith.addf %2, %4 : vector<8x32xf32>
    %6 = math.tanh %5 : vector<8x32xf32>
    %c0_5 = arith.constant 0 : index
    %c0_6 = arith.constant 0 : index
    %7 = vector.load %arg4[%c0_5, %c0_6] : memref<32x32xf32, #tpu.memory_space<vmem>>, vector<32x32xf32>
    %cst_7 = arith.constant dense<0.000000e+00> : vector<8x32xf32>
    %8 = tpu.matmul %6, %7, %cst_7 {dimension_numbers = #tpu.dot_dimension_numbers<[1], [0], [0], [1], [0, 0, 1, 1], [], []>} : vector<8x32xf32>, vector<32x32xf32>, vector<8x32xf32> -> vector<8x32xf32>
    %c0_8 = arith.constant 0 : index
    %c0_9 = arith.constant 0 : index
    %9 = vector.load %arg5[%c0_8, %c0_9] : memref<1x32xf32, #tpu.memory_space<vmem>>, vector<1x32xf32>
    %10 = vector.broadcast %9 : vector<1x32xf32> to vector<8x32xf32>
    %11 = arith.addf %8, %10 : vector<8x32xf32>
    %cst_10 = arith.constant 0.000000e+00 : f32
    %12 = vector.broadcast %cst_10 : f32 to vector<8x32xf32>
    %13 = arith.maximumf %11, %12 : vector<8x32xf32>
    %14 = math.absf %11 : vector<8x32xf32>
    %cst_11 = arith.constant 0.000000e+00 : f32
    %15 = vector.broadcast %cst_11 : f32 to vector<8x32xf32>
    %16 = arith.subf %15, %14 : vector<8x32xf32>
    %17 = math.exp %16 : vector<8x32xf32>
    %cst_12 = arith.constant 1.000000e+00 : f32
    %18 = vector.broadcast %cst_12 : f32 to vector<8x32xf32>
    %19 = arith.addf %18, %17 : vector<8x32xf32>
    %20 = math.log %19 : vector<8x32xf32>
    %21 = arith.addf %13, %20 : vector<8x32xf32>
    %22 = math.tanh %21 : vector<8x32xf32>
    %23 = arith.mulf %11, %22 : vector<8x32xf32>
    %24 = arith.mulf %23, %23 : vector<8x32xf32>
    %c0_13 = arith.constant 0 : index
    %c0_14 = arith.constant 0 : index
    %25 = vector.load %arg6[%c0_13, %c0_14] : memref<32x32xf32, #tpu.memory_space<vmem>>, vector<32x32xf32>
    %cst_15 = arith.constant dense<0.000000e+00> : vector<8x32xf32>
    %26 = tpu.matmul %24, %25, %cst_15 {dimension_numbers = #tpu.dot_dimension_numbers<[1], [0], [0], [1], [0, 0, 1, 1], [], []>} : vector<8x32xf32>, vector<32x32xf32>, vector<8x32xf32> -> vector<8x32xf32>
    %c0_16 = arith.constant 0 : index
    %c0_17 = arith.constant 0 : index
    %27 = vector.load %arg7[%c0_16, %c0_17] : memref<1x32xf32, #tpu.memory_space<vmem>>, vector<1x32xf32>
    %28 = vector.broadcast %27 : vector<1x32xf32> to vector<8x32xf32>
    %29 = arith.addf %26, %28 : vector<8x32xf32>
    %cst_18 = arith.constant 0.000000e+00 : f32
    %30 = vector.broadcast %cst_18 : f32 to vector<8x32xf32>
    %31 = arith.maximumf %29, %30 : vector<8x32xf32>
    %32 = math.absf %29 : vector<8x32xf32>
    %cst_19 = arith.constant 0.000000e+00 : f32
    %33 = vector.broadcast %cst_19 : f32 to vector<8x32xf32>
    %34 = arith.subf %33, %32 : vector<8x32xf32>
    %35 = math.exp %34 : vector<8x32xf32>
    %cst_20 = arith.constant 1.000000e+00 : f32
    %36 = vector.broadcast %cst_20 : f32 to vector<8x32xf32>
    %37 = arith.addf %36, %35 : vector<8x32xf32>
    %38 = math.log %37 : vector<8x32xf32>
    %39 = arith.addf %31, %38 : vector<8x32xf32>
    %40 = math.tanh %39 : vector<8x32xf32>
    %41 = arith.mulf %29, %40 : vector<8x32xf32>
    %c0_21 = arith.constant 0 : index
    %c0_22 = arith.constant 0 : index
    %42 = vector.load %arg8[%c0_21, %c0_22] : memref<32x1xf32, #tpu.memory_space<vmem>>, vector<32x1xf32>
    %cst_23 = arith.constant dense<0.000000e+00> : vector<8x1xf32>
    %43 = tpu.matmul %41, %42, %cst_23 {dimension_numbers = #tpu.dot_dimension_numbers<[1], [0], [0], [1], [0, 0, 1, 1], [], []>} : vector<8x32xf32>, vector<32x1xf32>, vector<8x1xf32> -> vector<8x1xf32>
    %c0_24 = arith.constant 0 : index
    %c0_25 = arith.constant 0 : index
    %44 = vector.load %arg9[%c0_24, %c0_25] : memref<1x1xf32, #tpu.memory_space<vmem>>, vector<1x1xf32>
    %45 = vector.broadcast %44 : vector<1x1xf32> to vector<8x1xf32>
    %46 = arith.addf %43, %45 : vector<8x1xf32>
    %47 = arith.mulf %23, %23 : vector<8x32xf32>
    %cst_26 = arith.constant 0.000000e+00 : f32
    %48 = vector.broadcast %cst_26 : f32 to vector<8x32xf32>
    %49 = arith.subf %48, %47 : vector<8x32xf32>
    %50 = math.exp %49 : vector<8x32xf32>
    %c0_27 = arith.constant 0 : index
    %c0_28 = arith.constant 0 : index
    %51 = vector.load %arg10[%c0_27, %c0_28] : memref<32x32xf32, #tpu.memory_space<vmem>>, vector<32x32xf32>
    %cst_29 = arith.constant dense<0.000000e+00> : vector<8x32xf32>
    %52 = tpu.matmul %50, %51, %cst_29 {dimension_numbers = #tpu.dot_dimension_numbers<[1], [0], [0], [1], [0, 0, 1, 1], [], []>} : vector<8x32xf32>, vector<32x32xf32>, vector<8x32xf32> -> vector<8x32xf32>
    %c0_30 = arith.constant 0 : index
    %c0_31 = arith.constant 0 : index
    %53 = vector.load %arg11[%c0_30, %c0_31] : memref<1x32xf32, #tpu.memory_space<vmem>>, vector<1x32xf32>
    %54 = vector.broadcast %53 : vector<1x32xf32> to vector<8x32xf32>
    %55 = arith.addf %52, %54 : vector<8x32xf32>
    %56 = arith.mulf %55, %55 : vector<8x32xf32>
    %cst_32 = arith.constant 0.000000e+00 : f32
    %57 = vector.broadcast %cst_32 : f32 to vector<8x32xf32>
    %58 = arith.subf %57, %56 : vector<8x32xf32>
    %59 = math.exp %58 : vector<8x32xf32>
    %c0_33 = arith.constant 0 : index
    %c0_34 = arith.constant 0 : index
    %60 = vector.load %arg12[%c0_33, %c0_34] : memref<32x1xf32, #tpu.memory_space<vmem>>, vector<32x1xf32>
    %cst_35 = arith.constant dense<0.000000e+00> : vector<8x1xf32>
    %61 = tpu.matmul %59, %60, %cst_35 {dimension_numbers = #tpu.dot_dimension_numbers<[1], [0], [0], [1], [0, 0, 1, 1], [], []>} : vector<8x32xf32>, vector<32x1xf32>, vector<8x1xf32> -> vector<8x1xf32>
    %c0_36 = arith.constant 0 : index
    %c0_37 = arith.constant 0 : index
    %62 = vector.load %arg13[%c0_36, %c0_37] : memref<1x1xf32, #tpu.memory_space<vmem>>, vector<1x1xf32>
    %63 = vector.broadcast %62 : vector<1x1xf32> to vector<8x1xf32>
    %64 = arith.addf %61, %63 : vector<8x1xf32>
    %65 = math.tanh %64 : vector<8x1xf32>
    %c0_38 = arith.constant 0 : index
    %c0_39 = arith.constant 0 : index
    %66 = vector.load %arg14[%c0_38, %c0_39] : memref<32x32xf32, #tpu.memory_space<vmem>>, vector<32x32xf32>
    %cst_40 = arith.constant dense<0.000000e+00> : vector<8x32xf32>
    %67 = tpu.matmul %50, %66, %cst_40 {dimension_numbers = #tpu.dot_dimension_numbers<[1], [0], [0], [1], [0, 0, 1, 1], [], []>} : vector<8x32xf32>, vector<32x32xf32>, vector<8x32xf32> -> vector<8x32xf32>
    %c0_41 = arith.constant 0 : index
    %c0_42 = arith.constant 0 : index
    %68 = vector.load %arg15[%c0_41, %c0_42] : memref<1x32xf32, #tpu.memory_space<vmem>>, vector<1x32xf32>
    %69 = vector.broadcast %68 : vector<1x32xf32> to vector<8x32xf32>
    %70 = arith.addf %67, %69 : vector<8x32xf32>
    %71 = arith.mulf %70, %70 : vector<8x32xf32>
    %cst_43 = arith.constant 0.000000e+00 : f32
    %72 = vector.broadcast %cst_43 : f32 to vector<8x32xf32>
    %73 = arith.subf %72, %71 : vector<8x32xf32>
    %74 = math.exp %73 : vector<8x32xf32>
    %c0_44 = arith.constant 0 : index
    %c0_45 = arith.constant 0 : index
    %75 = vector.load %arg16[%c0_44, %c0_45] : memref<32x1xf32, #tpu.memory_space<vmem>>, vector<32x1xf32>
    %cst_46 = arith.constant dense<0.000000e+00> : vector<8x1xf32>
    %76 = tpu.matmul %74, %75, %cst_46 {dimension_numbers = #tpu.dot_dimension_numbers<[1], [0], [0], [1], [0, 0, 1, 1], [], []>} : vector<8x32xf32>, vector<32x1xf32>, vector<8x1xf32> -> vector<8x1xf32>
    %c0_47 = arith.constant 0 : index
    %c0_48 = arith.constant 0 : index
    %77 = vector.load %arg17[%c0_47, %c0_48] : memref<1x1xf32, #tpu.memory_space<vmem>>, vector<1x1xf32>
    %78 = vector.broadcast %77 : vector<1x1xf32> to vector<8x1xf32>
    %79 = arith.addf %76, %78 : vector<8x1xf32>
    %80 = arith.mulf %79, %79 : vector<8x1xf32>
    %cst_49 = arith.constant 0.000000e+00 : f32
    %81 = vector.broadcast %cst_49 : f32 to vector<8x1xf32>
    %82 = arith.subf %81, %80 : vector<8x1xf32>
    %83 = math.exp %82 : vector<8x1xf32>
    %c0_50 = arith.constant 0 : index
    %c0_51 = arith.constant 0 : index
    %84 = vector.load %arg18[%c0_50, %c0_51] : memref<1x1xf32, #tpu.memory_space<vmem>>, vector<1x1xf32>
    %85 = vector.broadcast %84 : vector<1x1xf32> to vector<8x1xf32>
    %86 = arith.mulf %85, %83 : vector<8x1xf32>
    %87 = math.exp %86 : vector<8x1xf32>
    %c0_52 = arith.constant 0 : index
    %c0_53 = arith.constant 0 : index
    %88 = vector.load %arg19[%c0_52, %c0_53] : memref<8x1xf32, #tpu.memory_space<vmem>>, vector<8x1xf32>
    tpu.vector_store %arg19[%c0_52, %c0_53], %65 {strides = array<i32>} : memref<8x1xf32, #tpu.memory_space<vmem>>, vector<8x1xf32>,
    %c0_54 = arith.constant 0 : index
    %c0_55 = arith.constant 0 : index
    %89 = vector.load %arg20[%c0_54, %c0_55] : memref<8x1xf32, #tpu.memory_space<vmem>>, vector<8x1xf32>
    tpu.vector_store %arg20[%c0_54, %c0_55], %87 {strides = array<i32>} : memref<8x1xf32, #tpu.memory_space<vmem>>, vector<8x1xf32>,
    %c0_56 = arith.constant 0 : index
    %c0_57 = arith.constant 0 : index
    %90 = vector.load %arg21[%c0_56, %c0_57] : memref<8x1xf32, #tpu.memory_space<vmem>>, vector<8x1xf32>
    tpu.vector_store %arg21[%c0_56, %c0_57], %46 {strides = array<i32>} : memref<8x1xf32, #tpu.memory_space<vmem>>, vector<8x1xf32>,
    return
  }
  func.func @transform_0(%arg0: i32) -> (i32, i32) {
    %c0_i32 = arith.constant 0 : i32
    %c0_i32_0 = arith.constant 0 : i32
    return %arg0, %c0_i32 : i32, i32
  }
  func.func @transform_1(%arg0: i32) -> (i32, i32) {
    %c0_i32 = arith.constant 0 : i32
    %c0_i32_0 = arith.constant 0 : i32
    %c0_i32_1 = arith.constant 0 : i32
    return %c0_i32, %c0_i32_0 : i32, i32
  }
  func.func @transform_2(%arg0: i32) -> (i32, i32) {
    %c0_i32 = arith.constant 0 : i32
    %c0_i32_0 = arith.constant 0 : i32
    %c0_i32_1 = arith.constant 0 : i32
    return %c0_i32, %c0_i32_0 : i32, i32
  }
  func.func @transform_3(%arg0: i32) -> (i32, i32) {
    %c0_i32 = arith.constant 0 : i32
    %c0_i32_0 = arith.constant 0 : i32
    %c0_i32_1 = arith.constant 0 : i32
    return %c0_i32, %c0_i32_0 : i32, i32
  }
  func.func @transform_4(%arg0: i32) -> (i32, i32) {
    %c0_i32 = arith.constant 0 : i32
    %c0_i32_0 = arith.constant 0 : i32
    %c0_i32_1 = arith.constant 0 : i32
    return %c0_i32, %c0_i32_0 : i32, i32
  }
  func.func @transform_5(%arg0: i32) -> (i32, i32) {
    %c0_i32 = arith.constant 0 : i32
    %c0_i32_0 = arith.constant 0 : i32
    %c0_i32_1 = arith.constant 0 : i32
    return %c0_i32, %c0_i32_0 : i32, i32
  }
  func.func @transform_6(%arg0: i32) -> (i32, i32) {
    %c0_i32 = arith.constant 0 : i32
    %c0_i32_0 = arith.constant 0 : i32
    %c0_i32_1 = arith.constant 0 : i32
    return %c0_i32, %c0_i32_0 : i32, i32
  }
  func.func @transform_7(%arg0: i32) -> (i32, i32) {
    %c0_i32 = arith.constant 0 : i32
    %c0_i32_0 = arith.constant 0 : i32
    %c0_i32_1 = arith.constant 0 : i32
    return %c0_i32, %c0_i32_0 : i32, i32
  }
  func.func @transform_8(%arg0: i32) -> (i32, i32) {
    %c0_i32 = arith.constant 0 : i32
    %c0_i32_0 = arith.constant 0 : i32
    %c0_i32_1 = arith.constant 0 : i32
    return %c0_i32, %c0_i32_0 : i32, i32
  }
  func.func @transform_9(%arg0: i32) -> (i32, i32) {
    %c0_i32 = arith.constant 0 : i32
    %c0_i32_0 = arith.constant 0 : i32
    %c0_i32_1 = arith.constant 0 : i32
    return %c0_i32, %c0_i32_0 : i32, i32
  }
  func.func @transform_10(%arg0: i32) -> (i32, i32) {
    %c0_i32 = arith.constant 0 : i32
    %c0_i32_0 = arith.constant 0 : i32
    %c0_i32_1 = arith.constant 0 : i32
    return %c0_i32, %c0_i32_0 : i32, i32
  }
  func.func @transform_11(%arg0: i32) -> (i32, i32) {
    %c0_i32 = arith.constant 0 : i32
    %c0_i32_0 = arith.constant 0 : i32
    %c0_i32_1 = arith.constant 0 : i32
    return %c0_i32, %c0_i32_0 : i32, i32
  }
  func.func @transform_12(%arg0: i32) -> (i32, i32) {
    %c0_i32 = arith.constant 0 : i32
    %c0_i32_0 = arith.constant 0 : i32
    %c0_i32_1 = arith.constant 0 : i32
    return %c0_i32, %c0_i32_0 : i32, i32
  }
  func.func @transform_13(%arg0: i32) -> (i32, i32) {
    %c0_i32 = arith.constant 0 : i32
    %c0_i32_0 = arith.constant 0 : i32
    %c0_i32_1 = arith.constant 0 : i32
    return %c0_i32, %c0_i32_0 : i32, i32
  }
  func.func @transform_14(%arg0: i32) -> (i32, i32) {
    %c0_i32 = arith.constant 0 : i32
    %c0_i32_0 = arith.constant 0 : i32
    %c0_i32_1 = arith.constant 0 : i32
    return %c0_i32, %c0_i32_0 : i32, i32
  }
  func.func @transform_15(%arg0: i32) -> (i32, i32) {
    %c0_i32 = arith.constant 0 : i32
    %c0_i32_0 = arith.constant 0 : i32
    %c0_i32_1 = arith.constant 0 : i32
    return %c0_i32, %c0_i32_0 : i32, i32
  }
  func.func @transform_16(%arg0: i32) -> (i32, i32) {
    %c0_i32 = arith.constant 0 : i32
    %c0_i32_0 = arith.constant 0 : i32
    %c0_i32_1 = arith.constant 0 : i32
    return %c0_i32, %c0_i32_0 : i32, i32
  }
  func.func @transform_17(%arg0: i32) -> (i32, i32) {
    %c0_i32 = arith.constant 0 : i32
    %c0_i32_0 = arith.constant 0 : i32
    %c0_i32_1 = arith.constant 0 : i32
    return %c0_i32, %c0_i32_0 : i32, i32
  }
  func.func @transform_18(%arg0: i32) -> (i32, i32) {
    %c0_i32 = arith.constant 0 : i32
    %c0_i32_0 = arith.constant 0 : i32
    return %arg0, %c0_i32 : i32, i32
  }
  func.func @transform_19(%arg0: i32) -> (i32, i32) {
    %c0_i32 = arith.constant 0 : i32
    %c0_i32_0 = arith.constant 0 : i32
    return %arg0, %c0_i32 : i32, i32
  }
  func.func @transform_20(%arg0: i32) -> (i32, i32) {
    %c0_i32 = arith.constant 0 : i32
    %c0_i32_0 = arith.constant 0 : i32
    return %arg0, %c0_i32 : i32, i32
  }
}

</mosaic_0001>

<llo_original>
// kernel: actor_critic_forward.1
$region0: #{actor_critic_forward.1}
  #allocation0 [shape = 'u32[]', space=smem, size = 0x4, offset = 0x4, fixed_abs, tag = 'smem constant byte address 0x4 - core index']
  #allocation1 [shape = 'u32[144,128]{1,0:T(1,128)}', space=vmem, size = 0x12000, scoped, tag = 'internal scratch']
  #allocation2 [shape = 'f32[1,1]{1,0:T(1,128)S(1)}', space=vmem, size = 0x200, scoped, tag = 'scoped memory for actor_critic_forward.1']
  #allocation3 [shape = 'f32[1,1]{1,0:T(1,128)S(1)}', space=vmem, size = 0x200, scoped, tag = 'scoped memory for actor_critic_forward.1']
  #allocation4 [shape = 'f32[1,1]{1,0:T(1,128)S(1)}', space=vmem, size = 0x200, scoped, tag = 'scoped memory for actor_critic_forward.1']
  #allocation5 [shape = 'f32[1,1]{1,0:T(1,128)S(1)}', space=vmem, size = 0x200, scoped, tag = 'scoped memory for actor_critic_forward.1']
  %s0 = inlined_call_operand.vmem [shape: f32[8,4], index: 0, kind: input, shape index: {}]
  %s1 = inlined_call_operand.vmem [shape: f32[4,32], index: 1, kind: input, shape index: {}]
  %s2 = inlined_call_operand.vmem [shape: f32[1,32], index: 2, kind: input, shape index: {}]
  %s3 = inlined_call_operand.vmem [shape: f32[32,32], index: 3, kind: input, shape index: {}]
  %s4 = inlined_call_operand.vmem [shape: f32[1,32], index: 4, kind: input, shape index: {}]
  %s5 = inlined_call_operand.vmem [shape: f32[32,32], index: 5, kind: input, shape index: {}]
  %s6 = inlined_call_operand.hbm [shape: f32[1,32], index: 6, kind: input, shape index: {}]
  %s7 = inlined_call_operand.vmem [shape: f32[32,1], index: 7, kind: input, shape index: {}]
  %s8 = inlined_call_operand.<no memory space> [shape: f32[1,1], index: 8, kind: input, shape index: {}]
  %s9 = inlined_call_operand.vmem [shape: f32[32,32], index: 9, kind: input, shape index: {}]
  %s10 = inlined_call_operand.vmem [shape: f32[1,32], index: 10, kind: input, shape index: {}]
  %s11 = inlined_call_operand.vmem [shape: f32[32,1], index: 11, kind: input, shape index: {}]
  %s12 = inlined_call_operand.<no memory space> [shape: f32[1,1], index: 12, kind: input, shape index: {}]
  %s13 = inlined_call_operand.vmem [shape: f32[32,32], index: 13, kind: input, shape index: {}]
  %s14 = inlined_call_operand.vmem [shape: f32[1,32], index: 14, kind: input, shape index: {}]
  %s15 = inlined_call_operand.vmem [shape: f32[32,1], index: 15, kind: input, shape index: {}]
  %s16 = inlined_call_operand.<no memory space> [shape: f32[1,1], index: 16, kind: input, shape index: {}]
  %s17 = inlined_call_operand.<no memory space> [shape: f32[1,1], index: 17, kind: input, shape index: {}]
  %s18 = inlined_call_operand.vmem [shape: f32[8,1], index: 18, kind: output, shape index: {0}]
  %s19 = inlined_call_operand.vmem [shape: f32[8,1], index: 19, kind: output, shape index: {1}]
  %s20 = inlined_call_operand.vmem [shape: f32[8,1], index: 20, kind: output, shape index: {2}]
  %21 = xla_tuple %s18, %s19, %s20
  %s22 = sld [smem:[#allocation0]]
  $region102: #{actor_critic_forward.1} parent=0
    _
  %s24 = ssub.s32 1, %s22
  %s25 = scalar_select 0, %s24, %s22
  %v26 = vstv %s8
  %27 = vst [vmem:[#allocation2] sm:$0x1] %v26
  %v28 = vstv %s12
  %29 = vst [vmem:[#allocation3] sm:$0x1] %v28
  %v30 = vstv %s16
  %31 = vst [vmem:[#allocation4] sm:$0x1] %v30
  %v32 = vstv %s17
  %33 = vst [vmem:[#allocation5] sm:$0x1] %v32
  $region1: #{actor_critic_forward.1} parent=0
    #allocation6 [shape = 'u8[512]{0}', space=vmem, size = 0x400, scoped, tag = 'input window, operand 6, single buffered']
    #allocation7 [shape = 's32[1]{0}', space=sflag, size = 0x4, scoped, tag = 'scoped memory for actor_critic_forward.1']
    %34 = vsyncpa [#allocation7], 0
    // Predicated region
    $region2: #{actor_critic_forward.1} parent=1 // pred_check
      _
    $region3: #{actor_critic_forward.1} parent=1 // pred_check_branch
      %36 = sbr.rel (0) target = $region5
    $region4: #{actor_critic_forward.1} parent=1 // pred_region
      _
    $region5: #{actor_critic_forward.1} parent=1 // pred_fallthru
      _
    // Predicated region
    $region6: #{actor_critic_forward.1} parent=1 // pred_check
      _
    $region7: #{actor_critic_forward.1} parent=1 // pred_check_branch
      %38 = sbr.rel (0) target = $region9
    $region8: #{actor_critic_forward.1} parent=1 // pred_region
      _
    $region9: #{actor_critic_forward.1} parent=1 // pred_fallthru
      _
    // Predicated region
    $region10: #{actor_critic_forward.1} parent=1 // pred_check
      _
    $region11: #{actor_critic_forward.1} parent=1 // pred_check_branch
      %40 = sbr.rel (0) target = $region13
    $region12: #{actor_critic_forward.1} parent=1 // pred_region
      _
    $region13: #{actor_critic_forward.1} parent=1 // pred_fallthru
      _
    // Predicated region
    $region14: #{actor_critic_forward.1} parent=1 // pred_check
      _
    $region15: #{actor_critic_forward.1} parent=1 // pred_check_branch
      %42 = sbr.rel (0) target = $region17
    $region16: #{actor_critic_forward.1} parent=1 // pred_region
      _
    $region17: #{actor_critic_forward.1} parent=1 // pred_fallthru
      _
    // Predicated region
    $region18: #{actor_critic_forward.1} parent=1 // pred_check
      _
    $region19: #{actor_critic_forward.1} parent=1 // pred_check_branch
      %44 = sbr.rel (0) target = $region21
    $region20: #{actor_critic_forward.1} parent=1 // pred_region
      _
    $region21: #{actor_critic_forward.1} parent=1 // pred_fallthru
      _
    // Predicated region
    $region22: #{actor_critic_forward.1} parent=1 // pred_check
      _
    $region23: #{actor_critic_forward.1} parent=1 // pred_check_branch
      %46 = sbr.rel (0) target = $region25
    $region24: #{actor_critic_forward.1} parent=1 // pred_region
      _
    $region25: #{actor_critic_forward.1} parent=1 // pred_fallthru
      _
    // Predicated region
    $region26: #{actor_critic_forward.1} parent=1 // pred_check
      _
    $region27: #{actor_critic_forward.1} parent=1 // pred_check_branch
      %48 = sbr.rel (0) target = $region29
    $region28: #{actor_critic_forward.1} parent=1 // pred_region
      %s50 = ssub.s32 16, 16
      %51 = vsyncadd [#allocation7], %s50
      %s53 = sshll.u32 [#allocation6], 4
      %s54 = int_to_ptr.vmem [resolvable:$true] %s53
      %56 = dma.hbm_to_vmem [thread:$0]  %s6, 16, %s54, [#allocation7]
    $region29: #{actor_critic_forward.1} parent=1 // pred_fallthru
      _
    // Predicated region
    $region30: #{actor_critic_forward.1} parent=1 // pred_check
      _
    $region31: #{actor_critic_forward.1} parent=1 // pred_check_branch
      %58 = sbr.rel (0) target = $region33
    $region32: #{actor_critic_forward.1} parent=1 // pred_region
      _
    $region33: #{actor_critic_forward.1} parent=1 // pred_fallthru
      _
    // Predicated region
    $region34: #{actor_critic_forward.1} parent=1 // pred_check
      _
    $region35: #{actor_critic_forward.1} parent=1 // pred_check_branch
      %60 = sbr.rel (0) target = $region37
    $region36: #{actor_critic_forward.1} parent=1 // pred_region
      _
    $region37: #{actor_critic_forward.1} parent=1 // pred_fallthru
      _
    // Predicated region
    $region38: #{actor_critic_forward.1} parent=1 // pred_check
      _
    $region39: #{actor_critic_forward.1} parent=1 // pred_check_branch
      %62 = sbr.rel (0) target = $region41
    $region40: #{actor_critic_forward.1} parent=1 // pred_region
      _
    $region41: #{actor_critic_forward.1} parent=1 // pred_fallthru
      _
    // Predicated region
    $region42: #{actor_critic_forward.1} parent=1 // pred_check
      _
    $region43: #{actor_critic_forward.1} parent=1 // pred_check_branch
      %64 = sbr.rel (0) target = $region45
    $region44: #{actor_critic_forward.1} parent=1 // pred_region
      _
    $region45: #{actor_critic_forward.1} parent=1 // pred_fallthru
      _
    // Predicated region
    $region46: #{actor_critic_forward.1} parent=1 // pred_check
      _
    $region47: #{actor_critic_forward.1} parent=1 // pred_check_branch
      %66 = sbr.rel (0) target = $region49
    $region48: #{actor_critic_forward.1} parent=1 // pred_region
      _
    $region49: #{actor_critic_forward.1} parent=1 // pred_fallthru
      _
    // Predicated region
    $region50: #{actor_critic_forward.1} parent=1 // pred_check
      _
    $region51: #{actor_critic_forward.1} parent=1 // pred_check_branch
      %68 = sbr.rel (0) target = $region53
    $region52: #{actor_critic_forward.1} parent=1 // pred_region
      _
    $region53: #{actor_critic_forward.1} parent=1 // pred_fallthru
      _
    // Predicated region
    $region54: #{actor_critic_forward.1} parent=1 // pred_check
      _
    $region55: #{actor_critic_forward.1} parent=1 // pred_check_branch
      %70 = sbr.rel (0) target = $region57
    $region56: #{actor_critic_forward.1} parent=1 // pred_region
      _
    $region57: #{actor_critic_forward.1} parent=1 // pred_fallthru
      _
    // Predicated region
    $region58: #{actor_critic_forward.1} parent=1 // pred_check
      _
    $region59: #{actor_critic_forward.1} parent=1 // pred_check_branch
      %72 = sbr.rel (0) target = $region61
    $region60: #{actor_critic_forward.1} parent=1 // pred_region
      _
    $region61: #{actor_critic_forward.1} parent=1 // pred_fallthru
      _
    // Predicated region
    $region62: #{actor_critic_forward.1} parent=1 // pred_check
      _
    $region63: #{actor_critic_forward.1} parent=1 // pred_check_branch
      %74 = sbr.rel (0) target = $region65
    $region64: #{actor_critic_forward.1} parent=1 // pred_region
      _
    $region65: #{actor_critic_forward.1} parent=1 // pred_fallthru
      _
    // Predicated region
    $region66: #{actor_critic_forward.1} parent=1 // pred_check
      _
    $region67: #{actor_critic_forward.1} parent=1 // pred_check_branch
      %76 = sbr.rel (0) target = $region69
    $region68: #{actor_critic_forward.1} parent=1 // pred_region
      _
    $region69: #{actor_critic_forward.1} parent=1 // pred_fallthru
      _
    // Predicated region
    $region70: #{actor_critic_forward.1} parent=1 // pred_check
      _
    $region71: #{actor_critic_forward.1} parent=1 // pred_check_branch
      %78 = sbr.rel (0) target = $region73
    $region72: #{actor_critic_forward.1} parent=1 // pred_region
      _
    $region73: #{actor_critic_forward.1} parent=1 // pred_fallthru
      _
    // Predicated region
    $region74: #{actor_critic_forward.1} parent=1 // pred_check
      _
    $region75: #{actor_critic_forward.1} parent=1 // pred_check_branch
      %80 = sbr.rel (0) target = $region77
    $region76: #{actor_critic_forward.1} parent=1 // pred_region
      %81 = dma.done [#allocation7], 16
    $region77: #{actor_critic_forward.1} parent=1 // pred_fallthru
      _
    %v82 = vld [vmem:[%s0] sm:$0xff]
    %v83 = vld [vmem:[%s1] sm:$0xf]
    %v84 = vld [vmem:[%s2] sm:$0x1]
    %v86 = vlaneseq
    %v87 = vshrl.u32 %v86, 7
    %v88 = vsub.s32 0, %v87
    %v89 = vrot.slane %v84, %v88
    %vm91 = vcmask 31744
    %v93 = vsel %vm91, %v82, 0
    %vm95 = vcmask 1043456
    %v97 = vsel %vm95, %v83, 0
    %99 = vmatprep.subr.mxu0 0.0
    %100 = vmatpush1.msra.mxu0 %v97
    %101 = vmatprep.subr.mxu0 0.0
    %102 = vmatpush1.msra.mxu0 0.0
    %103 = vmatprep.subr.mxu0 0.0
    %104 = vmatpush1.msra.mxu0 0.0
    %105 = vmatprep.subr.mxu0 0.0
    %106 = vmatpush1.msra.mxu0 0.0
    %107 = vmatprep.subr.mxu0 0.0
    %108 = vmatpush1.msra.mxu0 0.0
    %109 = vmatprep.subr.mxu0 0.0
    %110 = vmatpush1.msra.mxu0 0.0
    %111 = vmatprep.subr.mxu0 0.0
    %112 = vmatpush1.msra.mxu0 0.0
    %113 = vmatprep.subr.mxu0 0.0
    %114 = vmatpush1.msra.mxu0 0.0
    %115 = vmatprep.subr.mxu0 0.0
    %116 = vmatpush1.msra.mxu0 0.0
    %117 = vmatprep.subr.mxu0 0.0
    %118 = vmatpush1.msra.mxu0 0.0
    %119 = vmatprep.subr.mxu0 0.0
    %120 = vmatpush1.msra.mxu0 0.0
    %121 = vmatprep.subr.mxu0 0.0
    %122 = vmatpush1.msra.mxu0 0.0
    %123 = vmatprep.subr.mxu0 0.0
    %124 = vmatpush1.msra.mxu0 0.0
    %125 = vmatprep.subr.mxu0 0.0
    %126 = vmatpush1.msra.mxu0 0.0
    %127 = vmatprep.subr.mxu0 0.0
    %128 = vmatpush1.msra.mxu0 0.0
    %129 = vmatprep.subr.mxu0 0.0
    %130 = vmatpush1.msra.mxu0 0.0
    %131 = vmatprep.subr.mxu0 0.0
    %132 = vmatpush1.msra.mxu0 0.0
    %133 = vmatprep.subr.mxu0 0.0
    %134 = vmatpush1.msra.mxu0 0.0
    %135 = vmatprep.subr.mxu0 0.0
    %136 = vmatpush1.msra.mxu0 0.0
    %137 = vmatprep.subr.mxu0 0.0
    %138 = vmatpush1.msra.mxu0 0.0
    %139 = vmatprep.subr.mxu0 0.0
    %140 = vmatpush1.msra.mxu0 0.0
    %141 = vmatprep.subr.mxu0 0.0
    %142 = vmatpush1.msra.mxu0 0.0
    %143 = vmatprep.subr.mxu0 0.0
    %144 = vmatpush1.msra.mxu0 0.0
    %145 = vmatprep.subr.mxu0 0.0
    %146 = vmatpush1.msra.mxu0 0.0
    %147 = vmatprep.subr.mxu0 0.0
    %148 = vmatpush1.msra.mxu0 0.0
    %149 = vmatprep.subr.mxu0 0.0
    %150 = vmatpush1.msra.mxu0 0.0
    %151 = vmatprep.subr.mxu0 0.0
    %152 = vmatpush1.msra.mxu0 0.0
    %153 = vmatprep.subr.mxu0 0.0
    %154 = vmatpush1.msra.mxu0 0.0
    %155 = vmatprep.subr.mxu0 0.0
    %156 = vmatpush1.msra.mxu0 0.0
    %157 = vmatprep.subr.mxu0 0.0
    %158 = vmatpush1.msra.mxu0 0.0
    %159 = vmatprep.subr.mxu0 0.0
    %160 = vmatpush1.msra.mxu0 0.0
    %161 = vmatprep.subr.mxu0 0.0
    %162 = vmatpush1.msra.mxu0 0.0
    %163 = vmatprep.mubr.f32.mxu0 0.0
    %164 = vmatmul.mubr.f32.gmra.mrb[0].mxu0 %v93
    %v165 = vpop.f32.mrb[0].mxu0
    %v166 = vadd.f32 %v89, %v165
    %v167 = vpop.f32.mrb[0].mxu0
    %168 = vdwg.mxu0
    %v169 = vtanh.pop %v166
    %v170 = vld [vmem:[%s3] sm:$0xff]
    %v171 = vld [vmem:[%s3 + $0x8] sm:$0xff]
    %v172 = vld [vmem:[%s3 + $0x10] sm:$0xff]
    %v173 = vld [vmem:[%s3 + $0x18] sm:$0xff]
    %v174 = vld [vmem:[%s4] sm:$0x1]
    %v176 = vlaneseq
    %v177 = vshrl.u32 %v176, 7
    %v178 = vsub.s32 0, %v177
    %v179 = vrot.slane %v174, %v178
    %vm181 = vcmask 261120
    %v183 = vsel %vm181, %v169, 0
    %185 = vmatprep.subr.mxu0 0.0
    %186 = vmatpush1.msra.mxu0 %v170
    %187 = vmatprep.subr.mxu0 0.0
    %188 = vmatpush1.msra.mxu0 %v171
    %189 = vmatprep.subr.mxu0 0.0
    %190 = vmatpush1.msra.mxu0 %v172
    %191 = vmatprep.subr.mxu0 0.0
    %192 = vmatpush1.msra.mxu0 %v173
    %193 = vmatprep.subr.mxu0 0.0
    %194 = vmatpush1.msra.mxu0 0.0
    %195 = vmatprep.subr.mxu0 0.0
    %196 = vmatpush1.msra.mxu0 0.0
    %197 = vmatprep.subr.mxu0 0.0
    %198 = vmatpush1.msra.mxu0 0.0
    %199 = vmatprep.subr.mxu0 0.0
    %200 = vmatpush1.msra.mxu0 0.0
    %201 = vmatprep.subr.mxu0 0.0
    %202 = vmatpush1.msra.mxu0 0.0
    %203 = vmatprep.subr.mxu0 0.0
    %204 = vmatpush1.msra.mxu0 0.0
    %205 = vmatprep.subr.mxu0 0.0
    %206 = vmatpush1.msra.mxu0 0.0
    %207 = vmatprep.subr.mxu0 0.0
    %208 = vmatpush1.msra.mxu0 0.0
    %209 = vmatprep.subr.mxu0 0.0
    %210 = vmatpush1.msra.mxu0 0.0
    %211 = vmatprep.subr.mxu0 0.0
    %212 = vmatpush1.msra.mxu0 0.0
    %213 = vmatprep.subr.mxu0 0.0
    %214 = vmatpush1.msra.mxu0 0.0
    %215 = vmatprep.subr.mxu0 0.0
    %216 = vmatpush1.msra.mxu0 0.0
    %217 = vmatprep.subr.mxu0 0.0
    %218 = vmatpush1.msra.mxu0 0.0
    %219 = vmatprep.subr.mxu0 0.0
    %220 = vmatpush1.msra.mxu0 0.0
    %221 = vmatprep.subr.mxu0 0.0
    %222 = vmatpush1.msra.mxu0 0.0
    %223 = vmatprep.subr.mxu0 0.0
    %224 = vmatpush1.msra.mxu0 0.0
    %225 = vmatprep.subr.mxu0 0.0
    %226 = vmatpush1.msra.mxu0 0.0
    %227 = vmatprep.subr.mxu0 0.0
    %228 = vmatpush1.msra.mxu0 0.0
    %229 = vmatprep.subr.mxu0 0.0
    %230 = vmatpush1.msra.mxu0 0.0
    %231 = vmatprep.subr.mxu0 0.0
    %232 = vmatpush1.msra.mxu0 0.0
    %233 = vmatprep.subr.mxu0 0.0
    %234 = vmatpush1.msra.mxu0 0.0
    %235 = vmatprep.subr.mxu0 0.0
    %236 = vmatpush1.msra.mxu0 0.0
    %237 = vmatprep.subr.mxu0 0.0
    %238 = vmatpush1.msra.mxu0 0.0
    %239 = vmatprep.subr.mxu0 0.0
    %240 = vmatpush1.msra.mxu0 0.0
    %241 = vmatprep.subr.mxu0 0.0
    %242 = vmatpush1.msra.mxu0 0.0
    %243 = vmatprep.subr.mxu0 0.0
    %244 = vmatpush1.msra.mxu0 0.0
    %245 = vmatprep.subr.mxu0 0.0
    %246 = vmatpush1.msra.mxu0 0.0
    %247 = vmatprep.subr.mxu0 0.0
    %248 = vmatpush1.msra.mxu0 0.0
    %249 = vmatprep.mubr.f32.mxu0 0.0
    %250 = vmatmul.mubr.f32.gmra.mrb[0].mxu0 %v183
    %v251 = vpop.f32.mrb[0].mxu0
    %v252 = vadd.f32 %v179, %v251
    %v253 = vpop.f32.mrb[0].mxu0
    %254 = vdwg.mxu0
    %v255 = vmax.f32 %v252, 0.0
    %v256 = vand.u32 2147483647, %v252
    %v257 = vsub.f32 0.0, %v256
    %v258 = vmul.f32 %v257, 1.442695
    %v259 = vpow.pop %v258
    %v260 = vadd.f32 %v259, 1.0
    %v261 = vlog2.pop %v260
    %v262 = vmul.f32 %v261, 0.6931472
    %v263 = vadd.f32 %v255, %v262
    %v264 = vtanh.pop %v263
    %v265 = vmul.f32 %v252, %v264
    %v266 = vmul.f32 %v265, %v265
    %v267 = vld [vmem:[%s5] sm:$0xff]
    %v268 = vld [vmem:[%s5 + $0x8] sm:$0xff]
    %v269 = vld [vmem:[%s5 + $0x10] sm:$0xff]
    %v270 = vld [vmem:[%s5 + $0x18] sm:$0xff]
    %v271 = vld [vmem:[#allocation6] sm:$0x1]
    %v273 = vlaneseq
    %v274 = vshrl.u32 %v273, 7
    %v275 = vsub.s32 0, %v274
    %v276 = vrot.slane %v271, %v275
    %v279 = vsel %vm181, %v266, 0
    %281 = vmatprep.subr.mxu0 0.0
    %282 = vmatpush1.msra.mxu0 %v267
    %283 = vmatprep.subr.mxu0 0.0
    %284 = vmatpush1.msra.mxu0 %v268
    %285 = vmatprep.subr.mxu0 0.0
    %286 = vmatpush1.msra.mxu0 %v269
    %287 = vmatprep.subr.mxu0 0.0
    %288 = vmatpush1.msra.mxu0 %v270
    %289 = vmatprep.subr.mxu0 0.0
    %290 = vmatpush1.msra.mxu0 0.0
    %291 = vmatprep.subr.mxu0 0.0
    %292 = vmatpush1.msra.mxu0 0.0
    %293 = vmatprep.subr.mxu0 0.0
    %294 = vmatpush1.msra.mxu0 0.0
    %295 = vmatprep.subr.mxu0 0.0
    %296 = vmatpush1.msra.mxu0 0.0
    %297 = vmatprep.subr.mxu0 0.0
    %298 = vmatpush1.msra.mxu0 0.0
    %299 = vmatprep.subr.mxu0 0.0
    %300 = vmatpush1.msra.mxu0 0.0
    %301 = vmatprep.subr.mxu0 0.0
    %302 = vmatpush1.msra.mxu0 0.0
    %303 = vmatprep.subr.mxu0 0.0
    %304 = vmatpush1.msra.mxu0 0.0
    %305 = vmatprep.subr.mxu0 0.0
    %306 = vmatpush1.msra.mxu0 0.0
    %307 = vmatprep.subr.mxu0 0.0
    %308 = vmatpush1.msra.mxu0 0.0
    %309 = vmatprep.subr.mxu0 0.0
    %310 = vmatpush1.msra.mxu0 0.0
    %311 = vmatprep.subr.mxu0 0.0
    %312 = vmatpush1.msra.mxu0 0.0
    %313 = vmatprep.subr.mxu0 0.0
    %314 = vmatpush1.msra.mxu0 0.0
    %315 = vmatprep.subr.mxu0 0.0
    %316 = vmatpush1.msra.mxu0 0.0
    %317 = vmatprep.subr.mxu0 0.0
    %318 = vmatpush1.msra.mxu0 0.0
    %319 = vmatprep.subr.mxu0 0.0
    %320 = vmatpush1.msra.mxu0 0.0
    %321 = vmatprep.subr.mxu0 0.0
    %322 = vmatpush1.msra.mxu0 0.0
    %323 = vmatprep.subr.mxu0 0.0
    %324 = vmatpush1.msra.mxu0 0.0
    %325 = vmatprep.subr.mxu0 0.0
    %326 = vmatpush1.msra.mxu0 0.0
    %327 = vmatprep.subr.mxu0 0.0
    %328 = vmatpush1.msra.mxu0 0.0
    %329 = vmatprep.subr.mxu0 0.0
    %330 = vmatpush1.msra.mxu0 0.0
    %331 = vmatprep.subr.mxu0 0.0
    %332 = vmatpush1.msra.mxu0 0.0
    %333 = vmatprep.subr.mxu0 0.0
    %334 = vmatpush1.msra.mxu0 0.0
    %335 = vmatprep.subr.mxu0 0.0
    %336 = vmatpush1.msra.mxu0 0.0
    %337 = vmatprep.subr.mxu0 0.0
    %338 = vmatpush1.msra.mxu0 0.0
    %339 = vmatprep.subr.mxu0 0.0
    %340 = vmatpush1.msra.mxu0 0.0
    %341 = vmatprep.subr.mxu0 0.0
    %342 = vmatpush1.msra.mxu0 0.0
    %343 = vmatprep.subr.mxu0 0.0
    %344 = vmatpush1.msra.mxu0 0.0
    %345 = vmatprep.mubr.f32.mxu0 0.0
    %346 = vmatmul.mubr.f32.gmra.mrb[0].mxu0 %v279
    %v347 = vpop.f32.mrb[0].mxu0
    %v348 = vadd.f32 %v276, %v347
    %v349 = vpop.f32.mrb[0].mxu0
    %350 = vdwg.mxu0
    %v351 = vmax.f32 %v348, 0.0
    %v352 = vand.u32 2147483647, %v348
    %v353 = vsub.f32 0.0, %v352
    %v354 = vmul.f32 %v353, 1.442695
    %v355 = vpow.pop %v354
    %v356 = vadd.f32 %v355, 1.0
    %v357 = vlog2.pop %v356
    %v358 = vmul.f32 %v357, 0.6931472
    %v359 = vadd.f32 %v351, %v358
    %v360 = vtanh.pop %v359
    %v361 = vmul.f32 %v348, %v360
    %v362 = vld [vmem:[%s7] sm:$0xff]
    %v363 = vld [vmem:[%s7 + $0x8] sm:$0xff]
    %v364 = vld [vmem:[%s7 + $0x10] sm:$0xff]
    %v365 = vld [vmem:[%s7 + $0x18] sm:$0xff]
    %v366 = vld [vmem:[#allocation2] sm:$0x1]
    %v368 = vlaneseq
    %v369 = vshrl.u32 %v368, 7
    %v370 = vsub.s32 0, %v369
    %v371 = vrot.slane %v366, %v370
    %v374 = vsel %vm181, %v361, 0
    %376 = vmatprep.subr.mxu0 0.0
    %377 = vmatpush1.msra.mxu0 %v362
    %378 = vmatprep.subr.mxu0 0.0
    %379 = vmatpush1.msra.mxu0 %v363
    %380 = vmatprep.subr.mxu0 0.0
    %381 = vmatpush1.msra.mxu0 %v364
    %382 = vmatprep.subr.mxu0 0.0
    %383 = vmatpush1.msra.mxu0 %v365
    %384 = vmatprep.subr.mxu0 0.0
    %385 = vmatpush1.msra.mxu0 0.0
    %386 = vmatprep.subr.mxu0 0.0
    %387 = vmatpush1.msra.mxu0 0.0
    %388 = vmatprep.subr.mxu0 0.0
    %389 = vmatpush1.msra.mxu0 0.0
    %390 = vmatprep.subr.mxu0 0.0
    %391 = vmatpush1.msra.mxu0 0.0
    %392 = vmatprep.subr.mxu0 0.0
    %393 = vmatpush1.msra.mxu0 0.0
    %394 = vmatprep.subr.mxu0 0.0
    %395 = vmatpush1.msra.mxu0 0.0
    %396 = vmatprep.subr.mxu0 0.0
    %397 = vmatpush1.msra.mxu0 0.0
    %398 = vmatprep.subr.mxu0 0.0
    %399 = vmatpush1.msra.mxu0 0.0
    %400 = vmatprep.subr.mxu0 0.0
    %401 = vmatpush1.msra.mxu0 0.0
    %402 = vmatprep.subr.mxu0 0.0
    %403 = vmatpush1.msra.mxu0 0.0
    %404 = vmatprep.subr.mxu0 0.0
    %405 = vmatpush1.msra.mxu0 0.0
    %406 = vmatprep.subr.mxu0 0.0
    %407 = vmatpush1.msra.mxu0 0.0
    %408 = vmatprep.subr.mxu0 0.0
    %409 = vmatpush1.msra.mxu0 0.0
    %410 = vmatprep.subr.mxu0 0.0
    %411 = vmatpush1.msra.mxu0 0.0
    %412 = vmatprep.subr.mxu0 0.0
    %413 = vmatpush1.msra.mxu0 0.0
    %414 = vmatprep.subr.mxu0 0.0
    %415 = vmatpush1.msra.mxu0 0.0
    %416 = vmatprep.subr.mxu0 0.0
    %417 = vmatpush1.msra.mxu0 0.0
    %418 = vmatprep.subr.mxu0 0.0
    %419 = vmatpush1.msra.mxu0 0.0
    %420 = vmatprep.subr.mxu0 0.0
    %421 = vmatpush1.msra.mxu0 0.0
    %422 = vmatprep.subr.mxu0 0.0
    %423 = vmatpush1.msra.mxu0 0.0
    %424 = vmatprep.subr.mxu0 0.0
    %425 = vmatpush1.msra.mxu0 0.0
    %426 = vmatprep.subr.mxu0 0.0
    %427 = vmatpush1.msra.mxu0 0.0
    %428 = vmatprep.subr.mxu0 0.0
    %429 = vmatpush1.msra.mxu0 0.0
    %430 = vmatprep.subr.mxu0 0.0
    %431 = vmatpush1.msra.mxu0 0.0
    %432 = vmatprep.subr.mxu0 0.0
    %433 = vmatpush1.msra.mxu0 0.0
    %434 = vmatprep.subr.mxu0 0.0
    %435 = vmatpush1.msra.mxu0 0.0
    %436 = vmatprep.subr.mxu0 0.0
    %437 = vmatpush1.msra.mxu0 0.0
    %438 = vmatprep.subr.mxu0 0.0
    %439 = vmatpush1.msra.mxu0 0.0
    %440 = vmatprep.mubr.f32.mxu0 0.0
    %441 = vmatmul.mubr.f32.gmra.mrb[0].mxu0 %v374
    %v442 = vpop.f32.mrb[0].mxu0
    %v443 = vadd.f32 %v371, %v442
    %v444 = vpop.f32.mrb[0].mxu0
    %445 = vdwg.mxu0
    %v446 = vsub.f32 0.0, %v266
    %v447 = vmul.f32 %v446, 1.442695
    %v448 = vpow.pop %v447
    %v449 = vld [vmem:[%s9] sm:$0xff]
    %v450 = vld [vmem:[%s9 + $0x8] sm:$0xff]
    %v451 = vld [vmem:[%s9 + $0x10] sm:$0xff]
    %v452 = vld [vmem:[%s9 + $0x18] sm:$0xff]
    %v453 = vld [vmem:[%s10] sm:$0x1]
    %v455 = vlaneseq
    %v456 = vshrl.u32 %v455, 7
    %v457 = vsub.s32 0, %v456
    %v458 = vrot.slane %v453, %v457
    %v461 = vsel %vm181, %v448, 0
    %463 = vmatprep.subr.mxu0 0.0
    %464 = vmatpush1.msra.mxu0 %v449
    %465 = vmatprep.subr.mxu0 0.0
    %466 = vmatpush1.msra.mxu0 %v450
    %467 = vmatprep.subr.mxu0 0.0
    %468 = vmatpush1.msra.mxu0 %v451
    %469 = vmatprep.subr.mxu0 0.0
    %470 = vmatpush1.msra.mxu0 %v452
    %471 = vmatprep.subr.mxu0 0.0
    %472 = vmatpush1.msra.mxu0 0.0
    %473 = vmatprep.subr.mxu0 0.0
    %474 = vmatpush1.msra.mxu0 0.0
    %475 = vmatprep.subr.mxu0 0.0
    %476 = vmatpush1.msra.mxu0 0.0
    %477 = vmatprep.subr.mxu0 0.0
    %478 = vmatpush1.msra.mxu0 0.0
    %479 = vmatprep.subr.mxu0 0.0
    %480 = vmatpush1.msra.mxu0 0.0
    %481 = vmatprep.subr.mxu0 0.0
    %482 = vmatpush1.msra.mxu0 0.0
    %483 = vmatprep.subr.mxu0 0.0
    %484 = vmatpush1.msra.mxu0 0.0
    %485 = vmatprep.subr.mxu0 0.0
    %486 = vmatpush1.msra.mxu0 0.0
    %487 = vmatprep.subr.mxu0 0.0
    %488 = vmatpush1.msra.mxu0 0.0
    %489 = vmatprep.subr.mxu0 0.0
    %490 = vmatpush1.msra.mxu0 0.0
    %491 = vmatprep.subr.mxu0 0.0
    %492 = vmatpush1.msra.mxu0 0.0
    %493 = vmatprep.subr.mxu0 0.0
    %494 = vmatpush1.msra.mxu0 0.0
    %495 = vmatprep.subr.mxu0 0.0
    %496 = vmatpush1.msra.mxu0 0.0
    %497 = vmatprep.subr.mxu0 0.0
    %498 = vmatpush1.msra.mxu0 0.0
    %499 = vmatprep.subr.mxu0 0.0
    %500 = vmatpush1.msra.mxu0 0.0
    %501 = vmatprep.subr.mxu0 0.0
    %502 = vmatpush1.msra.mxu0 0.0
    %503 = vmatprep.subr.mxu0 0.0
    %504 = vmatpush1.msra.mxu0 0.0
    %505 = vmatprep.subr.mxu0 0.0
    %506 = vmatpush1.msra.mxu0 0.0
    %507 = vmatprep.subr.mxu0 0.0
    %508 = vmatpush1.msra.mxu0 0.0
    %509 = vmatprep.subr.mxu0 0.0
    %510 = vmatpush1.msra.mxu0 0.0
    %511 = vmatprep.subr.mxu0 0.0
    %512 = vmatpush1.msra.mxu0 0.0
    %513 = vmatprep.subr.mxu0 0.0
    %514 = vmatpush1.msra.mxu0 0.0
    %515 = vmatprep.subr.mxu0 0.0
    %516 = vmatpush1.msra.mxu0 0.0
    %517 = vmatprep.subr.mxu0 0.0
    %518 = vmatpush1.msra.mxu0 0.0
    %519 = vmatprep.subr.mxu0 0.0
    %520 = vmatpush1.msra.mxu0 0.0
    %521 = vmatprep.subr.mxu0 0.0
    %522 = vmatpush1.msra.mxu0 0.0
    %523 = vmatprep.subr.mxu0 0.0
    %524 = vmatpush1.msra.mxu0 0.0
    %525 = vmatprep.subr.mxu0 0.0
    %526 = vmatpush1.msra.mxu0 0.0
    %527 = vmatprep.mubr.f32.mxu0 0.0
    %528 = vmatmul.mubr.f32.gmra.mrb[0].mxu0 %v461
    %v529 = vpop.f32.mrb[0].mxu0
    %v530 = vadd.f32 %v458, %v529
    %v531 = vpop.f32.mrb[0].mxu0
    %532 = vdwg.mxu0
    %v533 = vmul.f32 %v530, %v530
    %v534 = vsub.f32 0.0, %v533
    %v535 = vmul.f32 %v534, 1.442695
    %v536 = vpow.pop %v535
    %v537 = vld [vmem:[%s11] sm:$0xff]
    %v538 = vld [vmem:[%s11 + $0x8] sm:$0xff]
    %v539 = vld [vmem:[%s11 + $0x10] sm:$0xff]
    %v540 = vld [vmem:[%s11 + $0x18] sm:$0xff]
    %v541 = vld [vmem:[#allocation3] sm:$0x1]
    %v543 = vlaneseq
    %v544 = vshrl.u32 %v543, 7
    %v545 = vsub.s32 0, %v544
    %v546 = vrot.slane %v541, %v545
    %v549 = vsel %vm181, %v536, 0
    %551 = vmatprep.subr.mxu0 0.0
    %552 = vmatpush1.msra.mxu0 %v537
    %553 = vmatprep.subr.mxu0 0.0
    %554 = vmatpush1.msra.mxu0 %v538
    %555 = vmatprep.subr.mxu0 0.0
    %556 = vmatpush1.msra.mxu0 %v539
    %557 = vmatprep.subr.mxu0 0.0
    %558 = vmatpush1.msra.mxu0 %v540
    %559 = vmatprep.subr.mxu0 0.0
    %560 = vmatpush1.msra.mxu0 0.0
    %561 = vmatprep.subr.mxu0 0.0
    %562 = vmatpush1.msra.mxu0 0.0
    %563 = vmatprep.subr.mxu0 0.0
    %564 = vmatpush1.msra.mxu0 0.0
    %565 = vmatprep.subr.mxu0 0.0
    %566 = vmatpush1.msra.mxu0 0.0
    %567 = vmatprep.subr.mxu0 0.0
    %568 = vmatpush1.msra.mxu0 0.0
    %569 = vmatprep.subr.mxu0 0.0
    %570 = vmatpush1.msra.mxu0 0.0
    %571 = vmatprep.subr.mxu0 0.0
    %572 = vmatpush1.msra.mxu0 0.0
    %573 = vmatprep.subr.mxu0 0.0
    %574 = vmatpush1.msra.mxu0 0.0
    %575 = vmatprep.subr.mxu0 0.0
    %576 = vmatpush1.msra.mxu0 0.0
    %577 = vmatprep.subr.mxu0 0.0
    %578 = vmatpush1.msra.mxu0 0.0
    %579 = vmatprep.subr.mxu0 0.0
    %580 = vmatpush1.msra.mxu0 0.0
    %581 = vmatprep.subr.mxu0 0.0
    %582 = vmatpush1.msra.mxu0 0.0
    %583 = vmatprep.subr.mxu0 0.0
    %584 = vmatpush1.msra.mxu0 0.0
    %585 = vmatprep.subr.mxu0 0.0
    %586 = vmatpush1.msra.mxu0 0.0
    %587 = vmatprep.subr.mxu0 0.0
    %588 = vmatpush1.msra.mxu0 0.0
    %589 = vmatprep.subr.mxu0 0.0
    %590 = vmatpush1.msra.mxu0 0.0
    %591 = vmatprep.subr.mxu0 0.0
    %592 = vmatpush1.msra.mxu0 0.0
    %593 = vmatprep.subr.mxu0 0.0
    %594 = vmatpush1.msra.mxu0 0.0
    %595 = vmatprep.subr.mxu0 0.0
    %596 = vmatpush1.msra.mxu0 0.0
    %597 = vmatprep.subr.mxu0 0.0
    %598 = vmatpush1.msra.mxu0 0.0
    %599 = vmatprep.subr.mxu0 0.0
    %600 = vmatpush1.msra.mxu0 0.0
    %601 = vmatprep.subr.mxu0 0.0
    %602 = vmatpush1.msra.mxu0 0.0
    %603 = vmatprep.subr.mxu0 0.0
    %604 = vmatpush1.msra.mxu0 0.0
    %605 = vmatprep.subr.mxu0 0.0
    %606 = vmatpush1.msra.mxu0 0.0
    %607 = vmatprep.subr.mxu0 0.0
    %608 = vmatpush1.msra.mxu0 0.0
    %609 = vmatprep.subr.mxu0 0.0
    %610 = vmatpush1.msra.mxu0 0.0
    %611 = vmatprep.subr.mxu0 0.0
    %612 = vmatpush1.msra.mxu0 0.0
    %613 = vmatprep.subr.mxu0 0.0
    %614 = vmatpush1.msra.mxu0 0.0
    %615 = vmatprep.mubr.f32.mxu0 0.0
    %616 = vmatmul.mubr.f32.gmra.mrb[0].mxu0 %v549
    %v617 = vpop.f32.mrb[0].mxu0
    %v618 = vadd.f32 %v546, %v617
    %v619 = vpop.f32.mrb[0].mxu0
    %620 = vdwg.mxu0
    %v621 = vtanh.pop %v618
    %v622 = vld [vmem:[%s13] sm:$0xff]
    %v623 = vld [vmem:[%s13 + $0x8] sm:$0xff]
    %v624 = vld [vmem:[%s13 + $0x10] sm:$0xff]
    %v625 = vld [vmem:[%s13 + $0x18] sm:$0xff]
    %v626 = vld [vmem:[%s14] sm:$0x1]
    %v628 = vlaneseq
    %v629 = vshrl.u32 %v628, 7
    %v630 = vsub.s32 0, %v629
    %v631 = vrot.slane %v626, %v630
    %633 = vmatprep.subr.mxu0 0.0
    %634 = vmatpush1.msra.mxu0 %v622
    %635 = vmatprep.subr.mxu0 0.0
    %636 = vmatpush1.msra.mxu0 %v623
    %637 = vmatprep.subr.mxu0 0.0
    %638 = vmatpush1.msra.mxu0 %v624
    %639 = vmatprep.subr.mxu0 0.0
    %640 = vmatpush1.msra.mxu0 %v625
    %641 = vmatprep.subr.mxu0 0.0
    %642 = vmatpush1.msra.mxu0 0.0
    %643 = vmatprep.subr.mxu0 0.0
    %644 = vmatpush1.msra.mxu0 0.0
    %645 = vmatprep.subr.mxu0 0.0
    %646 = vmatpush1.msra.mxu0 0.0
    %647 = vmatprep.subr.mxu0 0.0
    %648 = vmatpush1.msra.mxu0 0.0
    %649 = vmatprep.subr.mxu0 0.0
    %650 = vmatpush1.msra.mxu0 0.0
    %651 = vmatprep.subr.mxu0 0.0
    %652 = vmatpush1.msra.mxu0 0.0
    %653 = vmatprep.subr.mxu0 0.0
    %654 = vmatpush1.msra.mxu0 0.0
    %655 = vmatprep.subr.mxu0 0.0
    %656 = vmatpush1.msra.mxu0 0.0
    %657 = vmatprep.subr.mxu0 0.0
    %658 = vmatpush1.msra.mxu0 0.0
    %659 = vmatprep.subr.mxu0 0.0
    %660 = vmatpush1.msra.mxu0 0.0
    %661 = vmatprep.subr.mxu0 0.0
    %662 = vmatpush1.msra.mxu0 0.0
    %663 = vmatprep.subr.mxu0 0.0
    %664 = vmatpush1.msra.mxu0 0.0
    %665 = vmatprep.subr.mxu0 0.0
    %666 = vmatpush1.msra.mxu0 0.0
    %667 = vmatprep.subr.mxu0 0.0
    %668 = vmatpush1.msra.mxu0 0.0
    %669 = vmatprep.subr.mxu0 0.0
    %670 = vmatpush1.msra.mxu0 0.0
    %671 = vmatprep.subr.mxu0 0.0
    %672 = vmatpush1.msra.mxu0 0.0
    %673 = vmatprep.subr.mxu0 0.0
    %674 = vmatpush1.msra.mxu0 0.0
    %675 = vmatprep.subr.mxu0 0.0
    %676 = vmatpush1.msra.mxu0 0.0
    %677 = vmatprep.subr.mxu0 0.0
    %678 = vmatpush1.msra.mxu0 0.0
    %679 = vmatprep.subr.mxu0 0.0
    %680 = vmatpush1.msra.mxu0 0.0
    %681 = vmatprep.subr.mxu0 0.0
    %682 = vmatpush1.msra.mxu0 0.0
    %683 = vmatprep.subr.mxu0 0.0
    %684 = vmatpush1.msra.mxu0 0.0
    %685 = vmatprep.subr.mxu0 0.0
    %686 = vmatpush1.msra.mxu0 0.0
    %687 = vmatprep.subr.mxu0 0.0
    %688 = vmatpush1.msra.mxu0 0.0
    %689 = vmatprep.subr.mxu0 0.0
    %690 = vmatpush1.msra.mxu0 0.0
    %691 = vmatprep.subr.mxu0 0.0
    %692 = vmatpush1.msra.mxu0 0.0
    %693 = vmatprep.subr.mxu0 0.0
    %694 = vmatpush1.msra.mxu0 0.0
    %695 = vmatprep.subr.mxu0 0.0
    %696 = vmatpush1.msra.mxu0 0.0
    %697 = vmatprep.mubr.f32.mxu0 0.0
    %698 = vmatmul.mubr.f32.gmra.mrb[0].mxu0 %v461
    %v699 = vpop.f32.mrb[0].mxu0
    %v700 = vadd.f32 %v631, %v699
    %v701 = vpop.f32.mrb[0].mxu0
    %702 = vdwg.mxu0
    %v703 = vmul.f32 %v700, %v700
    %v704 = vsub.f32 0.0, %v703
    %v705 = vmul.f32 %v704, 1.442695
    %v706 = vpow.pop %v705
    %v707 = vld [vmem:[%s15] sm:$0xff]
    %v708 = vld [vmem:[%s15 + $0x8] sm:$0xff]
    %v709 = vld [vmem:[%s15 + $0x10] sm:$0xff]
    %v710 = vld [vmem:[%s15 + $0x18] sm:$0xff]
    %v711 = vld [vmem:[#allocation4] sm:$0x1]
    %v713 = vlaneseq
    %v714 = vshrl.u32 %v713, 7
    %v715 = vsub.s32 0, %v714
    %v716 = vrot.slane %v711, %v715
    %v719 = vsel %vm181, %v706, 0
    %721 = vmatprep.subr.mxu0 0.0
    %722 = vmatpush1.msra.mxu0 %v707
    %723 = vmatprep.subr.mxu0 0.0
    %724 = vmatpush1.msra.mxu0 %v708
    %725 = vmatprep.subr.mxu0 0.0
    %726 = vmatpush1.msra.mxu0 %v709
    %727 = vmatprep.subr.mxu0 0.0
    %728 = vmatpush1.msra.mxu0 %v710
    %729 = vmatprep.subr.mxu0 0.0
    %730 = vmatpush1.msra.mxu0 0.0
    %731 = vmatprep.subr.mxu0 0.0
    %732 = vmatpush1.msra.mxu0 0.0
    %733 = vmatprep.subr.mxu0 0.0
    %734 = vmatpush1.msra.mxu0 0.0
    %735 = vmatprep.subr.mxu0 0.0
    %736 = vmatpush1.msra.mxu0 0.0
    %737 = vmatprep.subr.mxu0 0.0
    %738 = vmatpush1.msra.mxu0 0.0
    %739 = vmatprep.subr.mxu0 0.0
    %740 = vmatpush1.msra.mxu0 0.0
    %741 = vmatprep.subr.mxu0 0.0
    %742 = vmatpush1.msra.mxu0 0.0
    %743 = vmatprep.subr.mxu0 0.0
    %744 = vmatpush1.msra.mxu0 0.0
    %745 = vmatprep.subr.mxu0 0.0
    %746 = vmatpush1.msra.mxu0 0.0
    %747 = vmatprep.subr.mxu0 0.0
    %748 = vmatpush1.msra.mxu0 0.0
    %749 = vmatprep.subr.mxu0 0.0
    %750 = vmatpush1.msra.mxu0 0.0
    %751 = vmatprep.subr.mxu0 0.0
    %752 = vmatpush1.msra.mxu0 0.0
    %753 = vmatprep.subr.mxu0 0.0
    %754 = vmatpush1.msra.mxu0 0.0
    %755 = vmatprep.subr.mxu0 0.0
    %756 = vmatpush1.msra.mxu0 0.0
    %757 = vmatprep.subr.mxu0 0.0
    %758 = vmatpush1.msra.mxu0 0.0
    %759 = vmatprep.subr.mxu0 0.0
    %760 = vmatpush1.msra.mxu0 0.0
    %761 = vmatprep.subr.mxu0 0.0
    %762 = vmatpush1.msra.mxu0 0.0
    %763 = vmatprep.subr.mxu0 0.0
    %764 = vmatpush1.msra.mxu0 0.0
    %765 = vmatprep.subr.mxu0 0.0
    %766 = vmatpush1.msra.mxu0 0.0
    %767 = vmatprep.subr.mxu0 0.0
    %768 = vmatpush1.msra.mxu0 0.0
    %769 = vmatprep.subr.mxu0 0.0
    %770 = vmatpush1.msra.mxu0 0.0
    %771 = vmatprep.subr.mxu0 0.0
    %772 = vmatpush1.msra.mxu0 0.0
    %773 = vmatprep.subr.mxu0 0.0
    %774 = vmatpush1.msra.mxu0 0.0
    %775 = vmatprep.subr.mxu0 0.0
    %776 = vmatpush1.msra.mxu0 0.0
    %777 = vmatprep.subr.mxu0 0.0
    %778 = vmatpush1.msra.mxu0 0.0
    %779 = vmatprep.subr.mxu0 0.0
    %780 = vmatpush1.msra.mxu0 0.0
    %781 = vmatprep.subr.mxu0 0.0
    %782 = vmatpush1.msra.mxu0 0.0
    %783 = vmatprep.subr.mxu0 0.0
    %784 = vmatpush1.msra.mxu0 0.0
    %785 = vmatprep.mubr.f32.mxu0 0.0
    %786 = vmatmul.mubr.f32.gmra.mrb[0].mxu0 %v719
    %v787 = vpop.f32.mrb[0].mxu0
    %v788 = vadd.f32 %v716, %v787
    %v789 = vpop.f32.mrb[0].mxu0
    %790 = vdwg.mxu0
    %v791 = vmul.f32 %v788, %v788
    %v792 = vsub.f32 0.0, %v791
    %v793 = vmul.f32 %v792, 1.442695
    %v794 = vpow.pop %v793
    %v795 = vld [vmem:[#allocation5] sm:$0x1]
    %v797 = vlaneseq
    %v798 = vshrl.u32 %v797, 7
    %v799 = vsub.s32 0, %v798
    %v800 = vrot.slane %v795, %v799
    %v802 = vmul.f32 %v800, %v794
    %v803 = vmul.f32 %v802, 1.442695
    %v804 = vpow.pop %v803
    %vm805 = vcmask 7168
    %806 = vst.msk [vmem:[%s18] sm:$0xff] %vm805, %v621
    %807 = vst.msk [vmem:[%s19] sm:$0xff] %vm805, %v804
    %808 = vst.msk [vmem:[%s20] sm:$0xff] %vm805, %v443
    // Predicated region
    $region78: #{actor_critic_forward.1} parent=1 // pred_check
      _
    $region79: #{actor_critic_forward.1} parent=1 // pred_check_branch
      %810 = sbr.rel (0) target = $region81
    $region80: #{actor_critic_forward.1} parent=1 // pred_region
      _
    $region81: #{actor_critic_forward.1} parent=1 // pred_fallthru
      _
    // Predicated region
    $region82: #{actor_critic_forward.1} parent=1 // pred_check
      _
    $region83: #{actor_critic_forward.1} parent=1 // pred_check_branch
      %812 = sbr.rel (0) target = $region85
    $region84: #{actor_critic_forward.1} parent=1 // pred_region
      _
    $region85: #{actor_critic_forward.1} parent=1 // pred_fallthru
      _
    // Predicated region
    $region86: #{actor_critic_forward.1} parent=1 // pred_check
      _
    $region87: #{actor_critic_forward.1} parent=1 // pred_check_branch
      %814 = sbr.rel (0) target = $region89
    $region88: #{actor_critic_forward.1} parent=1 // pred_region
      _
    $region89: #{actor_critic_forward.1} parent=1 // pred_fallthru
      _
    // Predicated region
    $region90: #{actor_critic_forward.1} parent=1 // pred_check
      _
    $region91: #{actor_critic_forward.1} parent=1 // pred_check_branch
      %816 = sbr.rel (0) target = $region93
    $region92: #{actor_critic_forward.1} parent=1 // pred_region
      _
    $region93: #{actor_critic_forward.1} parent=1 // pred_fallthru
      _
    // Predicated region
    $region94: #{actor_critic_forward.1} parent=1 // pred_check
      _
    $region95: #{actor_critic_forward.1} parent=1 // pred_check_branch
      %818 = sbr.rel (0) target = $region97
    $region96: #{actor_critic_forward.1} parent=1 // pred_region
      _
    $region97: #{actor_critic_forward.1} parent=1 // pred_fallthru
      _
    // Predicated region
    $region98: #{actor_critic_forward.1} parent=1 // pred_check
      _
    $region99: #{actor_critic_forward.1} parent=1 // pred_check_branch
      %820 = sbr.rel (0) target = $region101
    $region100: #{actor_critic_forward.1} parent=1 // pred_region
      _
    $region101: #{actor_critic_forward.1} parent=1 // pred_fallthru
      _
    %821 = vsyncpa [#allocation7], 1

</llo_original>
